<compile_context>
chip_gen: v5e
topology: v5e:2x2
jax: 0.10.0
libtpu: 0.0.40
codegen_flags: <defaults>
</compile_context>

<pallas_src>
import jax
import jax.numpy as jnp
from jax.experimental import pallas as pl
from jax.experimental.pallas import tpu as pltpu


def _round_up(a: int, b: int) -> int:
    return (a + b - 1) // b * b


def _cdiv(a: int, b: int) -> int:
    return (a + b - 1) // b


# -----------------------------------------------------------------------------
# Generation-aware VMEM budgeting
# -----------------------------------------------------------------------------
def _vmem_budget() -> tuple:
    """Returns (working_set_budget_bytes, vmem_limit_bytes) for this TPU gen."""
    cap = None
    try:  # trace-time hardware query; fall back to conservative if unavailable
        cap = int(pltpu.get_tpu_info().vmem_capacity_bytes)
    except Exception:
        cap = None
    if cap is not None and cap >= (100 << 20):
        # v5e / v6e: 128 MiB physical VMEM -> big tiles, fewer grid steps.
        return 96 << 20, 112 << 20
    # v7x (64 MiB per TensorCore) or unknown: stay conservative.
    return 34 << 20, 52 << 20


# -----------------------------------------------------------------------------
# Kernels
# -----------------------------------------------------------------------------
def _zeros_linear_kernel(x_ref, w_ref, b_ref, s_ref, o_ref):
    """Single-K kernel: weight (K, N_pad) resident, x/out tiles stream over M."""
    # (1, N_pad) gain on the EUP, issued before the dot so it overlaps MXU work.
    gain = jnp.exp(s_ref[...] * 3.0)                    # literal 3 (matches forward())
    # In-kernel bf16 cast of the streamed x tile rides the VPU under MXU work.
    xb = x_ref[...].astype(jnp.bfloat16)                # (TILE_M, K)
    y = jnp.dot(xb, w_ref[...], preferred_element_type=jnp.float32)  # (TILE_M, N_pad)
    o_ref[...] = ((y + b_ref[...]) * gain).astype(o_ref.dtype)


def _zeros_linear_kernel_ktiled(x_ref, w_ref, b_ref, s_ref, o_ref, acc_ref):
    """K-tiled fallback for very large in_channels: f32 accumulator + epilogue."""
    kk = pl.program_id(1)

    @pl.when(kk == 0)
    def _():
        acc_ref[...] = jnp.zeros_like(acc_ref)

    xb = x_ref[...].astype(jnp.bfloat16)
    acc_ref[...] += jnp.dot(xb, w_ref[...], preferred_element_type=jnp.float32)

    @pl.when(kk == pl.num_programs(1) - 1)
    def _():
        gain = jnp.exp(s_ref[...] * 3.0)
        o_ref[...] = ((acc_ref[...] + b_ref[...]) * gain).astype(o_ref.dtype)


# -----------------------------------------------------------------------------
# Tiling
# -----------------------------------------------------------------------------
def _choose_tile_m_single_k(m16, k, n_pad, x_bytes, out_bytes, budget):
    """Largest M tile (multiple of 16) whose working set fits the VMEM budget."""

    def need(t):
        return (
            2 * t * k * x_bytes            # streamed x tile, double-buffered
            + t * k * 2                    # in-kernel bf16 copy of the x tile
            + 2 * t * n_pad * out_bytes    # streamed out tile, double-buffered
            + 2 * t * n_pad * 4            # f32 dot result + epilogue temporary
            + k * n_pad * 2                # resident weight (single-buffered)
            + 2 * n_pad * 4                # bias + scale (gain temp negligible)
            + (1 << 20)                    # slack for compiler-internal scratch
        )

    tile = m16                             # no artificial cap; the budget decides
    while tile > 16 and need(tile) > budget:
        tile = max(16, _round_up(tile // 2, 16))
    return tile


# -----------------------------------------------------------------------------
# pallas_call builders
# -----------------------------------------------------------------------------
_RESIDENT_SINGLE_BUFFER_OK = True   # flipped to False if pipeline_mode is rejected


def _resident_spec(block_shape, single_buffer):
    idx = lambda *_: (0, 0)   # constant index_map: block is resident across the grid
    if single_buffer:
        return pl.BlockSpec(block_shape, idx, pipeline_mode=pl.Buffered(1))
    return pl.BlockSpec(block_shape, idx)


def _call_single_k(x2, w2, b2, s2, tile_m, n_pad, out_dtype, vmem_limit, single_buffer):
    m16, k = x2.shape
    grid_m = _cdiv(m16, tile_m)
    out_bytes = jnp.dtype(out_dtype).itemsize
    cost = pl.CostEstimate(
        flops=2 * m16 * k * n_pad,
        transcendentals=grid_m * n_pad,
        bytes_accessed=(m16 * k * x2.dtype.itemsize + k * n_pad * 2
                        + 8 * n_pad + m16 * n_pad * out_bytes),
    )
    return pl.pallas_call(
        _zeros_linear_kernel,
        out_shape=jax.ShapeDtypeStruct((m16, n_pad), out_dtype),
        grid=(grid_m,),
        in_specs=[
            pl.BlockSpec((tile_m, k), lambda i: (i, 0)),     # x tile streams over M
            _resident_spec((k, n_pad), single_buffer),       # weight resident (K, N_pad)
            _resident_spec((1, n_pad), single_buffer),       # bias resident
            _resident_spec((1, n_pad), single_buffer),       # scale resident
        ],
        out_specs=pl.BlockSpec((tile_m, n_pad), lambda i: (i, 0)),
        compiler_params=pltpu.CompilerParams(
            dimension_semantics=("parallel",),
            vmem_limit_bytes=vmem_limit,
        ),
        cost_estimate=cost,
    )(x2, w2, b2, s2)


def _call_ktiled(x2, w2, b2, s2, tile_m, tile_k, n_pad, out_dtype, vmem_limit,
                 single_buffer):
    m16, k_pad = x2.shape
    grid_m = _cdiv(m16, tile_m)
    grid_k = k_pad // tile_k
    out_bytes = jnp.dtype(out_dtype).itemsize
    cost = pl.CostEstimate(
        flops=2 * m16 * k_pad * n_pad,
        transcendentals=grid_m * n_pad,
        bytes_accessed=(grid_k * m16 * tile_k * x2.dtype.itemsize
                        + grid_m * k_pad * n_pad * 2
                        + 8 * n_pad + m16 * n_pad * out_bytes),
    )
    return pl.pallas_call(
        _zeros_linear_kernel_ktiled,
        out_shape=jax.ShapeDtypeStruct((m16, n_pad), out_dtype),
        grid=(grid_m, grid_k),
        in_specs=[
            pl.BlockSpec((tile_m, tile_k), lambda i, kk: (i, kk)),   # x streams M, K
            pl.BlockSpec((tile_k, n_pad), lambda i, kk: (kk, 0)),    # W streams K
            _resident_spec((1, n_pad), single_buffer),               # bias resident
            _resident_spec((1, n_pad), single_buffer),               # scale resident
        ],
        out_specs=pl.BlockSpec((tile_m, n_pad), lambda i, kk: (i, 0)),
        scratch_shapes=[pltpu.VMEM((tile_m, n_pad), jnp.float32)],
        compiler_params=pltpu.CompilerParams(
            dimension_semantics=("parallel", "arbitrary"),
            vmem_limit_bytes=vmem_limit,
        ),
        cost_estimate=cost,
    )(x2, w2, b2, s2)


# -----------------------------------------------------------------------------
# Public wrapper
# -----------------------------------------------------------------------------
def zeros_linear(x, weight, bias, scale, out_dtype=None):
    """x: (..., in); weight: (out, in); bias/scale: (out,). Returns (..., out).

    Semantics match ZerosLinear.forward: (x @ W.T + b) * exp(scale * 3).
    Safe to wrap in jax.jit at the call site to fuse the cheap operand prep
    and output slice with surrounding computation.
    """
    global _RESIDENT_SINGLE_BUFFER_OK

    *lead, k = x.shape
    n = weight.shape[0]
    m = 1
    for d in lead:
        m *= d
    if out_dtype is None:
        out_dtype = x.dtype

    budget, vmem_limit = _vmem_budget()

    # ---- layout decisions ---------------------------------------------------
    n_pad = _round_up(max(n, 128), 128)     # lane-dense output columns
    m16 = _round_up(max(m, 16), 16)         # sublane granularity (f32 & bf16 safe)
    x_bytes = x.dtype.itemsize
    out_bytes = jnp.dtype(out_dtype).itemsize

    # ---- operand prep (one-time, amortized over all M tiles) -----------------
    x2 = x.reshape(m, k)
    if m16 != m:                            # rare ragged-M case only
        x2 = jnp.pad(x2, ((0, m16 - m), (0, 0)))
    # Pre-transpose + pad the weight to (K, N_pad) once: canonical MXU feed,
    # no per-grid-step relayout of the resident block.
    w2 = jnp.pad(weight.T.astype(jnp.bfloat16), ((0, 0), (0, n_pad - n)))
    b2 = jnp.pad(bias.astype(jnp.float32), (0, n_pad - n)).reshape(1, n_pad)
    s2 = jnp.pad(scale.astype(jnp.float32), (0, n_pad - n)).reshape(1, n_pad)
    # Padded W/b columns are zero; padded scale columns give gain = exp(0) = 1,
    # so padding never leaks into the sliced result.

    weight_resident_bytes = k * n_pad * 2
    use_ktiled = weight_resident_bytes > budget // 3
    tile_k = None

    if not use_ktiled:
        tile_m = _choose_tile_m_single_k(m16, k, n_pad, x_bytes, out_bytes, budget)
    else:
        # K-tiled fallback: zero-padded K so padded x columns x padded W rows
        # contribute nothing to the accumulator.
        # TODO(synk): add an N grid axis for out_channels so large that even a
        # (tile_k, N_pad) weight slab cannot fit in VMEM.
        tile_k = min(_round_up(k, 128), 1024)
        tile_m = m16
        while True:
            need = (2 * tile_m * tile_k * x_bytes + tile_m * tile_k * 2
                    + 2 * tile_k * n_pad * 2
                    + tile_m * n_pad * 4
                    + 2 * tile_m * n_pad * out_bytes
                    + 2 * tile_m * n_pad * 4
                    + 8 * n_pad + (1 << 20))
            if need <= budget:
                break
            if tile_m > 16:
                tile_m = max(16, _round_up(tile_m // 2, 16))
            elif tile_k > 128:
                tile_k = max(128, _round_up(tile_k // 2, 128))
            else:
                break
        k_pad = _round_up(k, tile_k)
        if k_pad != k:
            x2 = jnp.pad(x2, ((0, 0), (0, k_pad - k)))
            w2 = jnp.pad(w2, ((0, k_pad - k), (0, 0)))

    # Force >= 2 M tiles (when there are enough rows) so the "parallel" M axis
    # can split across both TensorCores on v7x; harmless no-op on v5e/v6e.
    if m16 >= 32:
        tile_m = min(tile_m, _round_up(_cdiv(m16, 2), 16))

    # ---- pallas_call (fallback rebuild if pipeline_mode is unsupported) ------
    def run(single_buffer):
        if use_ktiled:
            return _call_ktiled(x2, w2, b2, s2, tile_m, tile_k, n_pad,
                                out_dtype, vmem_limit, single_buffer)
        return _call_single_k(x2, w2, b2, s2, tile_m, n_pad,
                              out_dtype, vmem_limit, single_buffer)

    if _RESIDENT_SINGLE_BUFFER_OK:
        try:
            out = run(True)
        except Exception:
            _RESIDENT_SINGLE_BUFFER_OK = False
            out = run(False)
    else:
        out = run(False)

    return out[:m, :n].reshape(*lead, n)


if __name__ == "__main__":
    # Small shapes consistent with the module: batch=2, seq=8, in=32, out=16.
    in_channels, out_channels = 32, 16
    key = jax.random.PRNGKey(0)
    kx, kw, kb, ks = jax.random.split(key, 4)

    x = jax.random.normal(kx, (2, 8, in_channels), dtype=jnp.float32)

    # The module's __init__ zeros weight/bias/scale (true output would be 0).
    # Use deterministic NONZERO params so the compute path is actually exercised;
    # forward() semantics are identical.
    weight = jax.random.normal(kw, (out_channels, in_channels), dtype=jnp.float32) * 0.1
    bias = jax.random.normal(kb, (out_channels,), dtype=jnp.float32) * 0.1
    scale = jax.random.normal(ks, (out_channels,), dtype=jnp.float32) * 0.1

    out = zeros_linear(x, weight, bias, scale)
    out = jax.block_until_ready(out)

    # Tight check vs a reference with bf16-rounded operands (matches the MXU
    # bf16 x/W feed with f32 accumulation).
    xb = x.astype(jnp.bfloat16).astype(jnp.float32)
    wb = weight.astype(jnp.bfloat16).astype(jnp.float32)
    ref_bf16 = (xb @ wb.T + bias) * jnp.exp(scale * 3.0)
    assert out.shape == ref_bf16.shape
    assert jnp.allclose(out, ref_bf16, atol=2e-3, rtol=2e-3)

    # Loose check vs the pure-f32 reference (bf16 operand quantization only).
    ref_f32 = (x @ weight.T + bias) * jnp.exp(scale * 3.0)
    assert jnp.allclose(out, ref_f32, atol=5e-2, rtol=5e-2)

    # The module's actual zero-init behavior: output must be exactly zero.
    zero_out = zeros_linear(
        x,
        jnp.zeros((out_channels, in_channels), jnp.float32),
        jnp.zeros((out_channels,), jnp.float32),
        jnp.zeros((out_channels,), jnp.float32),
    )
    zero_out = jax.block_until_ready(zero_out)
    assert jnp.allclose(zero_out, jnp.zeros_like(zero_out))

    print("KERNEL_OK")
</pallas_src>

<mosaic_0001>
module attributes {stable_mosaic.version = 11 : i64} {
  func.func @_zeros_linear_kernel(%arg0: i32, %arg1: memref<16x32xf32, #tpu.memory_space<vmem>>, %arg2: memref<32x128xbf16, #tpu.memory_space<vmem>>, %arg3: memref<1x128xf32, #tpu.memory_space<vmem>>, %arg4: memref<1x128xf32, #tpu.memory_space<vmem>>, %arg5: memref<16x128xf32, #tpu.memory_space<vmem>>) attributes {dimension_semantics = [#tpu.dimension_semantics<parallel>], iteration_bounds = array<i64: 1>, scalar_prefetch = 0 : i64, scratch_operands = 0 : i64, tpu.core_type = #tpu.core_type<tc>, window_params = [{transform_indices = @transform_0, window_bounds = array<i64: 16, 32>}, {pipeline_mode = #tpu.pipeline_mode<synchronous>, transform_indices = @transform_1, window_bounds = array<i64: 32, 128>}, {pipeline_mode = #tpu.pipeline_mode<synchronous>, transform_indices = @transform_2, window_bounds = array<i64: 1, 128>}, {pipeline_mode = #tpu.pipeline_mode<synchronous>, transform_indices = @transform_3, window_bounds = array<i64: 1, 128>}, {transform_indices = @transform_4, window_bounds = array<i64: 16, 128>}]} {
    %c0 = arith.constant 0 : index
    %c0_0 = arith.constant 0 : index
    %0 = vector.load %arg4[%c0, %c0_0] : memref<1x128xf32, #tpu.memory_space<vmem>>, vector<1x128xf32>
    %cst = arith.constant 3.000000e+00 : f32
    %1 = vector.broadcast %cst : f32 to vector<1x128xf32>
    %2 = arith.mulf %0, %1 : vector<1x128xf32>
    %3 = math.exp %2 : vector<1x128xf32>
    %c0_1 = arith.constant 0 : index
    %c0_2 = arith.constant 0 : index
    %4 = vector.load %arg1[%c0_1, %c0_2] : memref<16x32xf32, #tpu.memory_space<vmem>>, vector<16x32xf32>
    %5 = arith.truncf %4 : vector<16x32xf32> to vector<16x32xbf16>
    %c0_3 = arith.constant 0 : index
    %c0_4 = arith.constant 0 : index
    %6 = vector.load %arg2[%c0_3, %c0_4] : memref<32x128xbf16, #tpu.memory_space<vmem>>, vector<32x128xbf16>
    %cst_5 = arith.constant dense<0.000000e+00> : vector<16x128xf32>
    %7 = tpu.matmul %5, %6, %cst_5 {dimension_numbers = #tpu.dot_dimension_numbers<[1], [0], [0], [1], [0, 0, 1, 1], [], []>} : vector<16x32xbf16>, vector<32x128xbf16>, vector<16x128xf32> -> vector<16x128xf32>
    %c0_6 = arith.constant 0 : index
    %c0_7 = arith.constant 0 : index
    %8 = vector.load %arg3[%c0_6, %c0_7] : memref<1x128xf32, #tpu.memory_space<vmem>>, vector<1x128xf32>
    %9 = vector.broadcast %8 : vector<1x128xf32> to vector<16x128xf32>
    %10 = arith.addf %7, %9 : vector<16x128xf32>
    %11 = vector.broadcast %3 : vector<1x128xf32> to vector<16x128xf32>
    %12 = arith.mulf %10, %11 : vector<16x128xf32>
    %c0_8 = arith.constant 0 : index
    %c0_9 = arith.constant 0 : index
    %13 = vector.load %arg5[%c0_8, %c0_9] : memref<16x128xf32, #tpu.memory_space<vmem>>, vector<16x128xf32>
    tpu.vector_store %arg5[%c0_8, %c0_9], %12 {strides = array<i32>} : memref<16x128xf32, #tpu.memory_space<vmem>>, vector<16x128xf32>,
    return
  }
  func.func @transform_0(%arg0: i32) -> (i32, i32) {
    %c0_i32 = arith.constant 0 : i32
    %c0_i32_0 = arith.constant 0 : i32
    return %arg0, %c0_i32 : i32, i32
  }
  func.func @transform_1(%arg0: i32) -> (i32, i32) {
    %c0_i32 = arith.constant 0 : i32
    %c0_i32_0 = arith.constant 0 : i32
    %c0_i32_1 = arith.constant 0 : i32
    return %c0_i32, %c0_i32_0 : i32, i32
  }
  func.func @transform_2(%arg0: i32) -> (i32, i32) {
    %c0_i32 = arith.constant 0 : i32
    %c0_i32_0 = arith.constant 0 : i32
    %c0_i32_1 = arith.constant 0 : i32
    return %c0_i32, %c0_i32_0 : i32, i32
  }
  func.func @transform_3(%arg0: i32) -> (i32, i32) {
    %c0_i32 = arith.constant 0 : i32
    %c0_i32_0 = arith.constant 0 : i32
    %c0_i32_1 = arith.constant 0 : i32
    return %c0_i32, %c0_i32_0 : i32, i32
  }
  func.func @transform_4(%arg0: i32) -> (i32, i32) {
    %c0_i32 = arith.constant 0 : i32
    %c0_i32_0 = arith.constant 0 : i32
    return %arg0, %c0_i32 : i32, i32
  }
}

module attributes {stable_mosaic.version = 11 : i64} {
  func.func @_zeros_linear_kernel(%arg0: i32, %arg1: memref<16x32xf32, #tpu.memory_space<vmem>>, %arg2: memref<32x128xbf16, #tpu.memory_space<vmem>>, %arg3: memref<1x128xf32, #tpu.memory_space<vmem>>, %arg4: memref<1x128xf32, #tpu.memory_space<vmem>>, %arg5: memref<16x128xf32, #tpu.memory_space<vmem>>) attributes {dimension_semantics = [#tpu.dimension_semantics<parallel>], iteration_bounds = array<i64: 1>, scalar_prefetch = 0 : i64, scratch_operands = 0 : i64, tpu.core_type = #tpu.core_type<tc>, window_params = [{transform_indices = @transform_0, window_bounds = array<i64: 16, 32>}, {pipeline_mode = #tpu.pipeline_mode<synchronous>, transform_indices = @transform_1, window_bounds = array<i64: 32, 128>}, {pipeline_mode = #tpu.pipeline_mode<synchronous>, transform_indices = @transform_2, window_bounds = array<i64: 1, 128>}, {pipeline_mode = #tpu.pipeline_mode<synchronous>, transform_indices = @transform_3, window_bounds = array<i64: 1, 128>}, {transform_indices = @transform_4, window_bounds = array<i64: 16, 128>}]} {
    %c0 = arith.constant 0 : index
    %c0_0 = arith.constant 0 : index
    %0 = vector.load %arg4[%c0, %c0_0] : memref<1x128xf32, #tpu.memory_space<vmem>>, vector<1x128xf32>
    %cst = arith.constant 3.000000e+00 : f32
    %1 = vector.broadcast %cst : f32 to vector<1x128xf32>
    %2 = arith.mulf %0, %1 : vector<1x128xf32>
    %3 = math.exp %2 : vector<1x128xf32>
    %c0_1 = arith.constant 0 : index
    %c0_2 = arith.constant 0 : index
    %4 = vector.load %arg1[%c0_1, %c0_2] : memref<16x32xf32, #tpu.memory_space<vmem>>, vector<16x32xf32>
    %5 = arith.truncf %4 : vector<16x32xf32> to vector<16x32xbf16>
    %c0_3 = arith.constant 0 : index
    %c0_4 = arith.constant 0 : index
    %6 = vector.load %arg2[%c0_3, %c0_4] : memref<32x128xbf16, #tpu.memory_space<vmem>>, vector<32x128xbf16>
    %cst_5 = arith.constant dense<0.000000e+00> : vector<16x128xf32>
    %7 = tpu.matmul %5, %6, %cst_5 {dimension_numbers = #tpu.dot_dimension_numbers<[1], [0], [0], [1], [0, 0, 1, 1], [], []>} : vector<16x32xbf16>, vector<32x128xbf16>, vector<16x128xf32> -> vector<16x128xf32>
    %c0_6 = arith.constant 0 : index
    %c0_7 = arith.constant 0 : index
    %8 = vector.load %arg3[%c0_6, %c0_7] : memref<1x128xf32, #tpu.memory_space<vmem>>, vector<1x128xf32>
    %9 = vector.broadcast %8 : vector<1x128xf32> to vector<16x128xf32>
    %10 = arith.addf %7, %9 : vector<16x128xf32>
    %11 = vector.broadcast %3 : vector<1x128xf32> to vector<16x128xf32>
    %12 = arith.mulf %10, %11 : vector<16x128xf32>
    %c0_8 = arith.constant 0 : index
    %c0_9 = arith.constant 0 : index
    %13 = vector.load %arg5[%c0_8, %c0_9] : memref<16x128xf32, #tpu.memory_space<vmem>>, vector<16x128xf32>
    tpu.vector_store %arg5[%c0_8, %c0_9], %12 {strides = array<i32>} : memref<16x128xf32, #tpu.memory_space<vmem>>, vector<16x128xf32>,
    return
  }
  func.func @transform_0(%arg0: i32) -> (i32, i32) {
    %c0_i32 = arith.constant 0 : i32
    %c0_i32_0 = arith.constant 0 : i32
    return %arg0, %c0_i32 : i32, i32
  }
  func.func @transform_1(%arg0: i32) -> (i32, i32) {
    %c0_i32 = arith.constant 0 : i32
    %c0_i32_0 = arith.constant 0 : i32
    %c0_i32_1 = arith.constant 0 : i32
    return %c0_i32, %c0_i32_0 : i32, i32
  }
  func.func @transform_2(%arg0: i32) -> (i32, i32) {
    %c0_i32 = arith.constant 0 : i32
    %c0_i32_0 = arith.constant 0 : i32
    %c0_i32_1 = arith.constant 0 : i32
    return %c0_i32, %c0_i32_0 : i32, i32
  }
  func.func @transform_3(%arg0: i32) -> (i32, i32) {
    %c0_i32 = arith.constant 0 : i32
    %c0_i32_0 = arith.constant 0 : i32
    %c0_i32_1 = arith.constant 0 : i32
    return %c0_i32, %c0_i32_0 : i32, i32
  }
  func.func @transform_4(%arg0: i32) -> (i32, i32) {
    %c0_i32 = arith.constant 0 : i32
    %c0_i32_0 = arith.constant 0 : i32
    return %arg0, %c0_i32 : i32, i32
  }
}

</mosaic_0001>

<llo_original>
// kernel: tpu_custom_call.1
$region0: #{tpu_custom_call.1}
  #allocation0 [shape = 'u32[]', space=smem, size = 0x4, offset = 0x4, fixed_abs, tag = 'smem constant byte address 0x4 - core index']
  #allocation1 [shape = 'u32[72,128]{1,0:T(1,128)}', space=vmem, size = 0x9000, scoped, tag = 'internal scratch']
  %s0 = inlined_call_operand.hbm [shape: f32[16,32], index: 0, kind: input, shape index: {}]
  %s1 = inlined_call_operand.hbm [shape: bf16[32,128], index: 1, kind: input, shape index: {}]
  %s2 = inlined_call_operand.vmem [shape: f32[1,128], index: 2, kind: input, shape index: {}]
  %s3 = inlined_call_operand.vmem [shape: f32[1,128], index: 3, kind: input, shape index: {}]
  %s4 = inlined_call_operand.hbm [shape: f32[16,128], index: 4, kind: output, shape index: {}]
  %s5 = sld [smem:[#allocation0]]
  $region34: #{tpu_custom_call.1} parent=0
    _
  %s7 = ssub.s32 1, %s5
  %s8 = scalar_select 0, %s7, %s5
  $region1: #{tpu_custom_call.1} parent=0
    #allocation2 [shape = 'u8[8192]{0}', space=vmem, size = 0x2000, scoped, tag = 'input window, operand 0, single buffered']
    #allocation3 [shape = 's32[1]{0}', space=sflag, size = 0x4, scoped, tag = 'scoped memory for tpu_custom_call.1']
    #allocation4 [shape = 's32[1]{0}', space=sflag, size = 0x4, scoped, tag = 'scoped memory for tpu_custom_call.1']
    #allocation5 [shape = 'u8[8192]{0}', space=vmem, size = 0x2000, scoped, tag = 'input window, operand 1, single buffered']
    #allocation6 [shape = 's32[1]{0}', space=sflag, size = 0x4, scoped, tag = 'scoped memory for tpu_custom_call.1']
    #allocation7 [shape = 'u8[8192]{0}', space=vmem, size = 0x2000, scoped, tag = 'output window, operand 0, single buffered']
    %9 = vsyncpa [#allocation3], 0
    %10 = vsyncpa [#allocation6], 0
    %11 = vsyncpa [#allocation4], 0
    // Predicated region
    $region2: #{tpu_custom_call.1} parent=1 // pred_check
      _
    $region3: #{tpu_custom_call.1} parent=1 // pred_check_branch
      %13 = sbr.rel (0) target = $region5
    $region4: #{tpu_custom_call.1} parent=1 // pred_region
      %15 = vsyncadd [#allocation3], 0
      %s16 = sshll.u32 %s0, 4
      %s17 = int_to_ptr.hbm [resolvable:$true] %s16
      %s18 = sshll.u32 [#allocation2], 4
      %s19 = int_to_ptr.vmem [resolvable:$true] %s18
      %24 = dma.hbm_to_vmem [thread:$0]  %s17, 256, %s19, [#allocation3], 128, 128, 8
    $region5: #{tpu_custom_call.1} parent=1 // pred_fallthru
      _
    // Predicated region
    $region6: #{tpu_custom_call.1} parent=1 // pred_check
      _
    $region7: #{tpu_custom_call.1} parent=1 // pred_check_branch
      %26 = sbr.rel (0) target = $region9
    $region8: #{tpu_custom_call.1} parent=1 // pred_region
      %28 = vsyncadd [#allocation6], 0
      %s29 = sshll.u32 %s1, 4
      %s30 = int_to_ptr.hbm [resolvable:$true] %s29
      %s31 = sshll.u32 [#allocation5], 4
      %s32 = int_to_ptr.vmem [resolvable:$true] %s31
      %37 = dma.hbm_to_vmem [thread:$0]  %s30, 256, %s32, [#allocation6], 64, 64, 4
    $region9: #{tpu_custom_call.1} parent=1 // pred_fallthru
      _
    // Predicated region
    $region10: #{tpu_custom_call.1} parent=1 // pred_check
      _
    $region11: #{tpu_custom_call.1} parent=1 // pred_check_branch
      %39 = sbr.rel (0) target = $region13
    $region12: #{tpu_custom_call.1} parent=1 // pred_region
      _
    $region13: #{tpu_custom_call.1} parent=1 // pred_fallthru
      _
    // Predicated region
    $region14: #{tpu_custom_call.1} parent=1 // pred_check
      _
    $region15: #{tpu_custom_call.1} parent=1 // pred_check_branch
      %41 = sbr.rel (0) target = $region17
    $region16: #{tpu_custom_call.1} parent=1 // pred_region
      _
    $region17: #{tpu_custom_call.1} parent=1 // pred_fallthru
      _
    // Predicated region
    $region18: #{tpu_custom_call.1} parent=1 // pred_check
      _
    $region19: #{tpu_custom_call.1} parent=1 // pred_check_branch
      %43 = sbr.rel (0) target = $region21
    $region20: #{tpu_custom_call.1} parent=1 // pred_region
      %45 = dma.done [#allocation3], 256
    $region21: #{tpu_custom_call.1} parent=1 // pred_fallthru
      _
    // Predicated region
    $region22: #{tpu_custom_call.1} parent=1 // pred_check
      _
    $region23: #{tpu_custom_call.1} parent=1 // pred_check_branch
      %47 = sbr.rel (0) target = $region25
    $region24: #{tpu_custom_call.1} parent=1 // pred_region
      %49 = dma.done [#allocation6], 256
    $region25: #{tpu_custom_call.1} parent=1 // pred_fallthru
      _
    %v51 = vld [vmem:[%s3] sm:$0x1]
    %v52 = vmul.f32 %v51, 3.0
    %v53 = vmul.f32 %v52, 1.442695
    %v54 = vpow.pop %v53
    %v55 = vld [vmem:[#allocation2] sm:$0xff]
    %v56 = vld [vmem:[#allocation2 + $0x8] sm:$0xff]
    %v57 = vpack.c.bf16 %v56, %v55
    %v58 = vld [vmem:[#allocation5] sm:$0xf]
    %v59 = vld [vmem:[#allocation5 + $0x4] sm:$0xf]
    %v60 = vld [vmem:[#allocation5 + $0x8] sm:$0xf]
    %v61 = vld [vmem:[#allocation5 + $0xc] sm:$0xf]
    %v62 = vld [vmem:[%s2] sm:$0x1]
    %v64 = vperm.slane %v62, 0
    %v70 = vunpack.c.l.b16 %v58
    %v71 = vunpack.c.l.b16 %v59
    %v72 = vunpack.c.l.b16 %v60
    %v73 = vunpack.c.l.b16 %v61
    %v74 = vpack.c.b16 %v71, %v70
    %v75 = vpack.c.b16 %v73, %v72
    %vm78 = vcmask 261120
    %v80 = vsel %vm78, %v57, 0
    %82 = vmatpush.bf16.msra.mxu0 0
    %83 = vmatpush.bf16.msra.mxu0 0
    %84 = vmatpush.bf16.msra.mxu0 0
    %85 = vmatpush.bf16.msra.mxu0 0
    %86 = vmatpush.bf16.msra.mxu0 0
    %87 = vmatpush.bf16.msra.mxu0 0
    %88 = vmatpush.bf16.msra.mxu0 %v75
    %89 = vmatpush.bf16.msra.mxu0 %v74
    %90 = vmatmul.bf16.gmra.mxu0 %v80
    %v91 = vpop.f32.mrf.mxu0
    %v92 = vadd.f32 %v64, %v91
    %v93 = vpop.f32.mrf.mxu0
    %v94 = vadd.f32 %v64, %v93
    %95 = vdwg.mxu0
    %v97 = vperm.slane %v54, 0
    %v99 = vmul.f32 %v92, %v97
    %v100 = vmul.f32 %v94, %v97
    %101 = vst [vmem:[#allocation7] sm:$0xff] %v99
    %102 = vst [vmem:[#allocation7 + $0x8] sm:$0xff] %v100
    // Predicated region
    $region26: #{tpu_custom_call.1} parent=1 // pred_check
      _
    $region27: #{tpu_custom_call.1} parent=1 // pred_check_branch
      %104 = sbr.rel (0) target = $region29
    $region28: #{tpu_custom_call.1} parent=1 // pred_region
      %106 = vsyncadd [#allocation4], 0
      %s107 = sshll.u32 [#allocation7], 4
      %s108 = int_to_ptr.vmem [resolvable:$true] %s107
      %s109 = sshll.u32 %s4, 4
      %s110 = int_to_ptr.hbm [resolvable:$true] %s109
      %115 = dma.vmem_to_hbm [thread:$0]  %s108, 256, %s110, [#allocation4], 128, 128, 8
    $region29: #{tpu_custom_call.1} parent=1 // pred_fallthru
      _
    // Predicated region
    $region30: #{tpu_custom_call.1} parent=1 // pred_check
      _
    $region31: #{tpu_custom_call.1} parent=1 // pred_check_branch
      %117 = sbr.rel (0) target = $region33
    $region32: #{tpu_custom_call.1} parent=1 // pred_region
      %119 = dma.done [#allocation4], 256
    $region33: #{tpu_custom_call.1} parent=1 // pred_fallthru
      _
    %120 = vsyncpa [#allocation3], 1
    %121 = vsyncpa [#allocation6], 1
    %122 = vsyncpa [#allocation4], 1

// kernel: tpu_custom_call.1
$region0: #{tpu_custom_call.1}
  #allocation0 [shape = 'u32[]', space=smem, size = 0x4, offset = 0x4, fixed_abs, tag = 'smem constant byte address 0x4 - core index']
  #allocation1 [shape = 'u32[72,128]{1,0:T(1,128)}', space=vmem, size = 0x9000, scoped, tag = 'internal scratch']
  %s0 = inlined_call_operand.hbm [shape: f32[16,32], index: 0, kind: input, shape index: {}]
  %s1 = inlined_call_operand.hbm [shape: bf16[32,128], index: 1, kind: input, shape index: {}]
  %s2 = inlined_call_operand.vmem [shape: f32[1,128], index: 2, kind: input, shape index: {}]
  %s3 = inlined_call_operand.vmem [shape: f32[1,128], index: 3, kind: input, shape index: {}]
  %s4 = inlined_call_operand.hbm [shape: f32[16,128], index: 4, kind: output, shape index: {}]
  %s5 = sld [smem:[#allocation0]]
  $region34: #{tpu_custom_call.1} parent=0
    _
  %s7 = ssub.s32 1, %s5
  %s8 = scalar_select 0, %s7, %s5
  $region1: #{tpu_custom_call.1} parent=0
    #allocation2 [shape = 'u8[8192]{0}', space=vmem, size = 0x2000, scoped, tag = 'input window, operand 0, single buffered']
    #allocation3 [shape = 's32[1]{0}', space=sflag, size = 0x4, scoped, tag = 'scoped memory for tpu_custom_call.1']
    #allocation4 [shape = 's32[1]{0}', space=sflag, size = 0x4, scoped, tag = 'scoped memory for tpu_custom_call.1']
    #allocation5 [shape = 'u8[8192]{0}', space=vmem, size = 0x2000, scoped, tag = 'input window, operand 1, single buffered']
    #allocation6 [shape = 's32[1]{0}', space=sflag, size = 0x4, scoped, tag = 'scoped memory for tpu_custom_call.1']
    #allocation7 [shape = 'u8[8192]{0}', space=vmem, size = 0x2000, scoped, tag = 'output window, operand 0, single buffered']
    %9 = vsyncpa [#allocation3], 0
    %10 = vsyncpa [#allocation6], 0
    %11 = vsyncpa [#allocation4], 0
    // Predicated region
    $region2: #{tpu_custom_call.1} parent=1 // pred_check
      _
    $region3: #{tpu_custom_call.1} parent=1 // pred_check_branch
      %13 = sbr.rel (0) target = $region5
    $region4: #{tpu_custom_call.1} parent=1 // pred_region
      %15 = vsyncadd [#allocation3], 0
      %s16 = sshll.u32 %s0, 4
      %s17 = int_to_ptr.hbm [resolvable:$true] %s16
      %s18 = sshll.u32 [#allocation2], 4
      %s19 = int_to_ptr.vmem [resolvable:$true] %s18
      %24 = dma.hbm_to_vmem [thread:$0]  %s17, 256, %s19, [#allocation3], 128, 128, 8
    $region5: #{tpu_custom_call.1} parent=1 // pred_fallthru
      _
    // Predicated region
    $region6: #{tpu_custom_call.1} parent=1 // pred_check
      _
    $region7: #{tpu_custom_call.1} parent=1 // pred_check_branch
      %26 = sbr.rel (0) target = $region9
    $region8: #{tpu_custom_call.1} parent=1 // pred_region
      %28 = vsyncadd [#allocation6], 0
      %s29 = sshll.u32 %s1, 4
      %s30 = int_to_ptr.hbm [resolvable:$true] %s29
      %s31 = sshll.u32 [#allocation5], 4
      %s32 = int_to_ptr.vmem [resolvable:$true] %s31
      %37 = dma.hbm_to_vmem [thread:$0]  %s30, 256, %s32, [#allocation6], 64, 64, 4
    $region9: #{tpu_custom_call.1} parent=1 // pred_fallthru
      _
    // Predicated region
    $region10: #{tpu_custom_call.1} parent=1 // pred_check
      _
    $region11: #{tpu_custom_call.1} parent=1 // pred_check_branch
      %39 = sbr.rel (0) target = $region13
    $region12: #{tpu_custom_call.1} parent=1 // pred_region
      _
    $region13: #{tpu_custom_call.1} parent=1 // pred_fallthru
      _
    // Predicated region
    $region14: #{tpu_custom_call.1} parent=1 // pred_check
      _
    $region15: #{tpu_custom_call.1} parent=1 // pred_check_branch
      %41 = sbr.rel (0) target = $region17
    $region16: #{tpu_custom_call.1} parent=1 // pred_region
      _
    $region17: #{tpu_custom_call.1} parent=1 // pred_fallthru
      _
    // Predicated region
    $region18: #{tpu_custom_call.1} parent=1 // pred_check
      _
    $region19: #{tpu_custom_call.1} parent=1 // pred_check_branch
      %43 = sbr.rel (0) target = $region21
    $region20: #{tpu_custom_call.1} parent=1 // pred_region
      %45 = dma.done [#allocation3], 256
    $region21: #{tpu_custom_call.1} parent=1 // pred_fallthru
      _
    // Predicated region
    $region22: #{tpu_custom_call.1} parent=1 // pred_check
      _
    $region23: #{tpu_custom_call.1} parent=1 // pred_check_branch
      %47 = sbr.rel (0) target = $region25
    $region24: #{tpu_custom_call.1} parent=1 // pred_region
      %49 = dma.done [#allocation6], 256
    $region25: #{tpu_custom_call.1} parent=1 // pred_fallthru
      _
    %v51 = vld [vmem:[%s3] sm:$0x1]
    %v52 = vmul.f32 %v51, 3.0
    %v53 = vmul.f32 %v52, 1.442695
    %v54 = vpow.pop %v53
    %v55 = vld [vmem:[#allocation2] sm:$0xff]
    %v56 = vld [vmem:[#allocation2 + $0x8] sm:$0xff]
    %v57 = vpack.c.bf16 %v56, %v55
    %v58 = vld [vmem:[#allocation5] sm:$0xf]
    %v59 = vld [vmem:[#allocation5 + $0x4] sm:$0xf]
    %v60 = vld [vmem:[#allocation5 + $0x8] sm:$0xf]
    %v61 = vld [vmem:[#allocation5 + $0xc] sm:$0xf]
    %v62 = vld [vmem:[%s2] sm:$0x1]
    %v64 = vperm.slane %v62, 0
    %v70 = vunpack.c.l.b16 %v58
    %v71 = vunpack.c.l.b16 %v59
    %v72 = vunpack.c.l.b16 %v60
    %v73 = vunpack.c.l.b16 %v61
    %v74 = vpack.c.b16 %v71, %v70
    %v75 = vpack.c.b16 %v73, %v72
    %vm78 = vcmask 261120
    %v80 = vsel %vm78, %v57, 0
    %82 = vmatpush.bf16.msra.mxu0 0
    %83 = vmatpush.bf16.msra.mxu0 0
    %84 = vmatpush.bf16.msra.mxu0 0
    %85 = vmatpush.bf16.msra.mxu0 0
    %86 = vmatpush.bf16.msra.mxu0 0
    %87 = vmatpush.bf16.msra.mxu0 0
    %88 = vmatpush.bf16.msra.mxu0 %v75
    %89 = vmatpush.bf16.msra.mxu0 %v74
    %90 = vmatmul.bf16.gmra.mxu0 %v80
    %v91 = vpop.f32.mrf.mxu0
    %v92 = vadd.f32 %v64, %v91
    %v93 = vpop.f32.mrf.mxu0
    %v94 = vadd.f32 %v64, %v93
    %95 = vdwg.mxu0
    %v97 = vperm.slane %v54, 0
    %v99 = vmul.f32 %v92, %v97
    %v100 = vmul.f32 %v94, %v97
    %101 = vst [vmem:[#allocation7] sm:$0xff] %v99
    %102 = vst [vmem:[#allocation7 + $0x8] sm:$0xff] %v100
    // Predicated region
    $region26: #{tpu_custom_call.1} parent=1 // pred_check
      _
    $region27: #{tpu_custom_call.1} parent=1 // pred_check_branch
      %104 = sbr.rel (0) target = $region29
    $region28: #{tpu_custom_call.1} parent=1 // pred_region
      %106 = vsyncadd [#allocation4], 0
      %s107 = sshll.u32 [#allocation7], 4
      %s108 = int_to_ptr.vmem [resolvable:$true] %s107
      %s109 = sshll.u32 %s4, 4
      %s110 = int_to_ptr.hbm [resolvable:$true] %s109
      %115 = dma.vmem_to_hbm [thread:$0]  %s108, 256, %s110, [#allocation4], 128, 128, 8
    $region29: #{tpu_custom_call.1} parent=1 // pred_fallthru
      _
    // Predicated region
    $region30: #{tpu_custom_call.1} parent=1 // pred_check
      _
    $region31: #{tpu_custom_call.1} parent=1 // pred_check_branch
      %117 = sbr.rel (0) target = $region33
    $region32: #{tpu_custom_call.1} parent=1 // pred_region
      %119 = dma.done [#allocation4], 256
    $region33: #{tpu_custom_call.1} parent=1 // pred_fallthru
      _
    %120 = vsyncpa [#allocation3], 1
    %121 = vsyncpa [#allocation6], 1
    %122 = vsyncpa [#allocation4], 1

</llo_original>
